<compile_context>
chip_gen: v7x
topology: tpu7x:2x2x1
jax: 0.10.0
libtpu: 0.0.40
codegen_flags: <defaults>
</compile_context>

<pallas_src>
import numpy as np
import jax
import jax.numpy as jnp
from jax import lax
from jax.experimental import pallas as pl
from jax.experimental.pallas import tpu as pltpu


# ----------------------------- Pallas kernel --------------------------------
def sinc_conv1d_kernel(x_ref, w_ref, o_ref):
    # x_ref: (C, Lpad)   -- full (padded) input row for this batch element
    # w_ref: (TO, K)     -- channel-shared sinc filters (weight tile)
    # o_ref: (TO, TL)    -- lane-dense output tile (TL multiple of 128)
    K = w_ref.shape[-1]
    TL = o_ref.shape[-1]

    li = pl.program_id(2)                         # Lout-tile index
    start = pl.multiple_of(li * TL, 128)          # aligned window start
    win = TL + K - 1                              # halo of K-1 samples

    # Load only the needed window and collapse the channel axis (weights are
    # identical across channels, so sum_c is exact).  C-1 cheap VPU adds.
    xw = x_ref[:, pl.ds(start, win)]              # (C, TL+K-1)
    xs = jnp.sum(xw, axis=0, keepdims=True)       # (1, TL+K-1)

    # im2col in vregs: row k is xs[k : k+TL]  ->  (K, TL); K is small & static.
    cols = jnp.concatenate([xs[:, k:k + TL] for k in range(K)], axis=0)

    # Single fused MXU contraction per tile: (TO, K) x (K, TL) -> (TO, TL).
    o_ref[...] = jnp.dot(
        w_ref[...], cols, preferred_element_type=jnp.float32
    ).astype(o_ref.dtype)


def sinc_conv1d(x, g):
    """Valid 1-D conv of x:(B,C,L) with channel-shared filters g:(O,K)."""
    B, C, L = x.shape
    O, K = g.shape
    Lout = L - K + 1
    assert Lout >= 1

    # Lane tile: as large as reasonable (up to 2048), multiple of 128.
    lout_pad = ((Lout + 127) // 128) * 128
    tl = int(min(2048, lout_pad))
    n_lt = pl.cdiv(Lout, tl)

    # Output-channel tile: full bank if small (always legal), else 256-wide
    # chunks (divisible by 8; partial last tile is masked on writeback).
    to = O if O <= 512 else 256
    n_ot = pl.cdiv(O, to)

    # Pad input so every output tile's halo window is in range (zeros only
    # influence masked / out-of-range output columns).
    lpad = n_lt * tl + K - 1
    if lpad > L:
        x = jnp.pad(x, ((0, 0), (0, 0), (0, lpad - L)))

    # Advisory cost estimate (post channel-sum algorithm).
    flops = int(2 * B * O * K * (n_lt * tl) + B * C * lpad)
    bytes_accessed = int(4 * (B * C * lpad + O * K + B * O * Lout))
    cost = pl.CostEstimate(
        flops=flops, transcendentals=0, bytes_accessed=bytes_accessed
    )

    # VMEM budget: double-buffered blocks + headroom, capped so the same
    # kernel also fits v7x's 64 MiB per-TC VMEM.
    block_bytes = 4 * (C * lpad + to * K + to * tl)
    vmem_limit = int(min(max(4 * block_bytes + (8 << 20), 16 << 20), 48 << 20))

    out = pl.pallas_call(
        sinc_conv1d_kernel,
        out_shape=jax.ShapeDtypeStruct((B, O, Lout), jnp.float32),
        grid=(B, n_ot, n_lt),
        in_specs=[
            # whole (padded) input row per batch; block index constant across
            # the inner grid axes -> fetched once per batch element.
            pl.BlockSpec((None, C, lpad), lambda b, oi, li: (b, 0, 0)),
            pl.BlockSpec((to, K), lambda b, oi, li: (oi, 0)),
        ],
        out_specs=pl.BlockSpec((None, to, tl), lambda b, oi, li: (b, oi, li)),
        compiler_params=pltpu.CompilerParams(
            dimension_semantics=("parallel", "parallel", "parallel"),
            vmem_limit_bytes=vmem_limit,
        ),
        cost_estimate=cost,
    )(x, g)

    return out


# --------------------------- filter construction -----------------------------
def f_to_m(f):
    return 2595.0 * jnp.log10(1.0 + f / 700.0)


def m_to_f(m):
    return 700.0 * (jnp.power(10.0, m / 2595.0) - 1.0)


def torch_sinc(z):
    # torch.sinc(z) = sin(pi*z)/(pi*z), with value 1 at z == 0.
    pz = jnp.pi * z
    safe = jnp.where(z == 0.0, 1.0, pz)
    return jnp.where(z == 0.0, 1.0, jnp.sin(pz) / safe)


def hamming_window(K):
    # torch.hamming_window default: periodic=True, alpha=0.54, beta=0.46
    n = jnp.arange(K, dtype=jnp.float32)
    return 0.54 - 0.46 * jnp.cos(2.0 * jnp.pi * n / K)


def init_sinc_params(key, out_channels, fs=16000.0):
    # Deterministic re-implementation of SincConvMC.__init__ parameter init.
    f_lowest = jnp.float32(0.0)
    f_highest = jnp.float32(fs / 2.0)
    m_lowest = f_to_m(f_lowest)
    m_highest = f_to_m(f_highest)
    k1, k2 = jax.random.split(key)
    r1 = jax.random.uniform(k1, (out_channels,), dtype=jnp.float32)
    r2 = jax.random.uniform(k2, (out_channels,), dtype=jnp.float32)
    m1_abs = r1 * (m_highest - m_lowest) / 2.0 + m_lowest
    m2_abs = m1_abs + jnp.abs(r2 * (m_highest - m_lowest) / 2.0 + m_lowest - m1_abs)
    m1_abs = m1_abs / 2.0
    f1_abs = m_to_f(m1_abs)
    f2_abs = m_to_f(m2_abs)
    f1 = f1_abs / fs             # nn.Parameter self.__f1
    fb = (f2_abs - f1_abs) / fs  # nn.Parameter self.__fb
    return f1, fb


def build_filter_bank(f1, fb, kernel_size):
    """Channel-shared sinc filter bank g: (O, K) -- no tiling across C needed."""
    n_space = jnp.arange(kernel_size, dtype=jnp.float32) - (kernel_size - 1) / 2.0
    window = hamming_window(kernel_size)
    f1_abs = jnp.abs(f1)
    f2_abs = f1_abs + fb
    f1_space = f1_abs[:, None] * n_space[None, :]
    f2_space = f2_abs[:, None] * n_space[None, :]
    g = 2.0 * (
        f2_abs[:, None] * torch_sinc(2.0 * np.pi * f2_space)
        - f1_abs[:, None] * torch_sinc(2.0 * np.pi * f1_space)
    ) * window[None, :]
    return g.astype(jnp.float32)


# --------------------------------- driver ------------------------------------
def sinc_conv_mc_forward(x, f1, fb, in_channels, out_channels, kernel_size):
    g = build_filter_bank(f1, fb, kernel_size)     # (O, K), channel-shared
    return sinc_conv1d(x, g)


if __name__ == "__main__":
    B, C, O, K, L = 2, 4, 8, 8, 32
    fs = 16000.0

    key = jax.random.PRNGKey(0)
    kx, kp = jax.random.split(key)
    x = jax.random.normal(kx, (B, C, L), dtype=jnp.float32)
    f1, fb = init_sinc_params(kp, O, fs)

    out = sinc_conv_mc_forward(x, f1, fb, C, O, K)
    out = jax.block_until_ready(out)

    # Reference check with XLA conv (same semantics as F.conv1d, no padding),
    # using the original channel-tiled weights.
    g = build_filter_bank(f1, fb, K)
    w_full = jnp.tile(g[:, None, :], (1, C, 1))
    ref = lax.conv_general_dilated(
        x, w_full, window_strides=(1,), padding="VALID",
        dimension_numbers=("NCH", "OIH", "NCH"),
    )
    assert out.shape == (B, O, L - K + 1)
    np.testing.assert_allclose(np.asarray(out), np.asarray(ref), rtol=1e-4, atol=1e-4)

    print("KERNEL_OK")
</pallas_src>

<mosaic_0001>
module attributes {stable_mosaic.version = 11 : i64} {
  func.func @sinc_conv1d_kernel(%arg0: i32, %arg1: i32, %arg2: i32, %arg3: memref<1x4x135xf32, #tpu.memory_space<vmem>>, %arg4: memref<8x8xf32, #tpu.memory_space<vmem>>, %arg5: memref<1x8x128xf32, #tpu.memory_space<vmem>>) attributes {dimension_semantics = [#tpu.dimension_semantics<parallel>, #tpu.dimension_semantics<parallel>, #tpu.dimension_semantics<parallel>], iteration_bounds = array<i64: 2, 1, 1>, scalar_prefetch = 0 : i64, scratch_operands = 0 : i64, tpu.core_type = #tpu.core_type<tc>, window_params = [{transform_indices = @transform_0, window_bounds = array<i64: 1, 4, 135>}, {transform_indices = @transform_1, window_bounds = array<i64: 8, 8>}, {transform_indices = @transform_2, window_bounds = array<i64: 1, 8, 128>}]} {
    %c128_i32 = arith.constant 128 : i32
    %0 = arith.muli %arg2, %c128_i32 : i32
    %1 = tpu.assume_multiple %0, 128 : i32
    %c0 = arith.constant 0 : index
    %c0_0 = arith.constant 0 : index
    %2 = arith.index_cast %1 : i32 to index
    %3 = vector.load %arg3[%c0, %c0_0, %2] : memref<1x4x135xf32, #tpu.memory_space<vmem>>, vector<1x4x135xf32>
    %4 = vector.shape_cast %3 : vector<1x4x135xf32> to vector<4x135xf32>
    %cst = arith.constant dense<0.000000e+00> : vector<135xf32>
    %5 = vector.multi_reduction <add>, %4, %cst [0] : vector<4x135xf32> to vector<135xf32>
    %6 = vector.shape_cast %5 : vector<135xf32> to vector<1x135xf32>
    %7 = vector.extract_strided_slice %6 {offsets = [0, 0], sizes = [1, 128], strides = [1, 1]} : vector<1x135xf32> to vector<1x128xf32>
    %8 = vector.extract_strided_slice %6 {offsets = [0, 1], sizes = [1, 128], strides = [1, 1]} : vector<1x135xf32> to vector<1x128xf32>
    %9 = vector.extract_strided_slice %6 {offsets = [0, 2], sizes = [1, 128], strides = [1, 1]} : vector<1x135xf32> to vector<1x128xf32>
    %10 = vector.extract_strided_slice %6 {offsets = [0, 3], sizes = [1, 128], strides = [1, 1]} : vector<1x135xf32> to vector<1x128xf32>
    %11 = vector.extract_strided_slice %6 {offsets = [0, 4], sizes = [1, 128], strides = [1, 1]} : vector<1x135xf32> to vector<1x128xf32>
    %12 = vector.extract_strided_slice %6 {offsets = [0, 5], sizes = [1, 128], strides = [1, 1]} : vector<1x135xf32> to vector<1x128xf32>
    %13 = vector.extract_strided_slice %6 {offsets = [0, 6], sizes = [1, 128], strides = [1, 1]} : vector<1x135xf32> to vector<1x128xf32>
    %14 = vector.extract_strided_slice %6 {offsets = [0, 7], sizes = [1, 128], strides = [1, 1]} : vector<1x135xf32> to vector<1x128xf32>
    %15 = tpu.concatenate %7, %8, %9, %10, %11, %12, %13, %14 in 0 : vector<1x128xf32>, vector<1x128xf32>, vector<1x128xf32>, vector<1x128xf32>, vector<1x128xf32>, vector<1x128xf32>, vector<1x128xf32>, vector<1x128xf32> -> vector<8x128xf32>
    %c0_1 = arith.constant 0 : index
    %c0_2 = arith.constant 0 : index
    %16 = vector.load %arg4[%c0_1, %c0_2] : memref<8x8xf32, #tpu.memory_space<vmem>>, vector<8x8xf32>
    %cst_3 = arith.constant dense<0.000000e+00> : vector<8x128xf32>
    %17 = tpu.matmul %16, %15, %cst_3 {dimension_numbers = #tpu.dot_dimension_numbers<[1], [0], [0], [1], [0, 0, 1, 1], [], []>} : vector<8x8xf32>, vector<8x128xf32>, vector<8x128xf32> -> vector<8x128xf32>
    %c0_4 = arith.constant 0 : index
    %c0_5 = arith.constant 0 : index
    %c0_6 = arith.constant 0 : index
    %18 = vector.load %arg5[%c0_4, %c0_5, %c0_6] : memref<1x8x128xf32, #tpu.memory_space<vmem>>, vector<1x8x128xf32>
    %19 = vector.shape_cast %18 : vector<1x8x128xf32> to vector<8x128xf32>
    %20 = vector.shape_cast %17 : vector<8x128xf32> to vector<1x8x128xf32>
    tpu.vector_store %arg5[%c0_4, %c0_5, %c0_6], %20 {strides = array<i32>} : memref<1x8x128xf32, #tpu.memory_space<vmem>>, vector<1x8x128xf32>,
    return
  }
  func.func @transform_0(%arg0: i32, %arg1: i32, %arg2: i32) -> (i32, i32, i32) {
    %c0_i32 = arith.constant 0 : i32
    %c0_i32_0 = arith.constant 0 : i32
    %c0_i32_1 = arith.constant 0 : i32
    return %arg0, %c0_i32, %c0_i32_0 : i32, i32, i32
  }
  func.func @transform_1(%arg0: i32, %arg1: i32, %arg2: i32) -> (i32, i32) {
    %c0_i32 = arith.constant 0 : i32
    %c0_i32_0 = arith.constant 0 : i32
    return %arg1, %c0_i32 : i32, i32
  }
  func.func @transform_2(%arg0: i32, %arg1: i32, %arg2: i32) -> (i32, i32, i32) {
    %c0_i32 = arith.constant 0 : i32
    return %arg0, %arg1, %arg2 : i32, i32, i32
  }
}

</mosaic_0001>

<llo_original>
// kernel: tpu_custom_call.1
$region0: #{tpu_custom_call.1}
  #allocation0 [shape = 'u32[]', space=smem, size = 0x4, offset = 0x4, fixed_abs, tag = 'smem constant byte address 0x4 - core index']
  #allocation1 [shape = 'u32[144,128]{1,0:T(1,128)}', space=vmem, size = 0x12000, scoped, tag = 'internal scratch']
  %s0 = inlined_call_operand.hbm [shape: f32[2,4,135], index: 0, kind: input, shape index: {}]
  %s1 = inlined_call_operand.hbm [shape: f32[8,8], index: 1, kind: input, shape index: {}]
  %s2 = inlined_call_operand.hbm [shape: f32[2,8,25], index: 2, kind: output, shape index: {}]
  %s3 = sld [smem:[#allocation0]]
  $region49: #{tpu_custom_call.1} parent=0
    _
  %s5 = ssub.s32 1, %s3
  %s6 = scalar_select 0, %s5, %s3
  $region1: #{tpu_custom_call.1} parent=0
    #allocation2 [shape = 'u8[8192]{0}', space=vmem, size = 0x2000, scoped, tag = 'input window, operand 0']
    #allocation3 [shape = 's32[2]{0}', space=sflag, size = 0x8, scoped, tag = 'scoped memory for tpu_custom_call.1']
    #allocation4 [shape = 's32[2]{0}', space=sflag, size = 0x8, scoped, tag = 'scoped memory for tpu_custom_call.1']
    #allocation5 [shape = 'u8[4096]{0}', space=vmem, size = 0x1000, scoped, tag = 'input window, operand 1, single buffered']
    #allocation6 [shape = 's32[1]{0}', space=sflag, size = 0x4, scoped, tag = 'scoped memory for tpu_custom_call.1']
    #allocation7 [shape = 'u8[8192]{0}', space=vmem, size = 0x2000, scoped, tag = 'output window, operand 0']
    %7 = vsyncpa [#allocation3], 0
    %s8 = scalar_lea.sflag [#allocation3], 1
    %9 = vsyncpa %s8, 0
    %10 = vsyncpa [#allocation6], 0
    %11 = vsyncpa [#allocation4], 0
    %s12 = scalar_lea.sflag [#allocation4], 1
    %13 = vsyncpa %s12, 0
    loop: start=0, step=1, limit=4
    $region2: #{tpu_custom_call.1} parent=1 // loop_pre_header
      _
    $region3: #{tpu_custom_call.1} parent=1 // loop_header
      %s15 = sphi 0, %s19
      %p16 = scmp.ge.s32.totalorder %s15, 4
      %s22 = sphi 0, %s41
      %s23 = sphi 0, %s37
      %s24 = sphi 0, %s33
      %s25 = sphi 0, %s22
      %s26 = sphi 0, %s23
      %s27 = sphi 0, %s24
      %s28 = sphi 0, %s25
      %s29 = sphi 0, %s26
      %s30 = sphi 0, %s27
      %s44 = sphi 0, %s46
      %s47 = sphi 0, %s44
      %s48 = sphi 0, %s47
      %s64 = sphi 0, %s48
      %s70 = sphi 0, %s72
      %s73 = sphi 0, %s70
      %s74 = sphi 0, %s73
      %s90 = sphi 0, %s74
      %s100 = sphi 0, %s102
      %s103 = sphi 0, %s100
      %s104 = sphi 0, %s103
      %s120 = sphi 0, %s104
    $region4: #{tpu_custom_call.1} parent=1 // loop_header_branch
      %18 = sbr.rel (%p16) target = $region8
    $region5: #{tpu_custom_call.1} parent=1 // loop_body
      %s20 = ssub.s32 %s15, 1
      %s21 = ssub.s32 %s15, 2
      %s31 = sadd.s32 1, %s24
      %p32 = scmp.ge.s32.totalorder %s31, 1
      %s33 = scalar_select %p32, 0, %s31
      %s34 = sadd.s32 1, %s23
      %s35 = scalar_select %p32, %s34, %s23
      %p36 = scmp.ge.s32.totalorder %s35, 1
      %s37 = scalar_select %p36, 0, %s35
      %s38 = sadd.s32 1, %s22
      %s39 = scalar_select %p36, %s38, %s22
      %p40 = scmp.ge.s32.totalorder %s39, 2
      %s41 = scalar_select %p40, 0, %s39
      %s42 = ssub.s32 %s22, %s41
      %p43 = scmp.eq.s32.totalorder %s42, 0
      %s45 = sadd.s32 %s44, 1
      %s46 = scalar_select %p43, %s44, %s45
      %p49 = pneg %p43
      %p50 = scmp.eq.s32.totalorder %s15, 1
      %p51 = por %p49, %p50
      %p52 = scmp.ne.s32.totalorder %s44, %s47
      %p53 = scmp.eq.s32.totalorder %s15, 0
      %p54 = por %p52, %p53
      %p55 = scmp.ne.s32.totalorder %s44, %s47
      %p56 = scmp.eq.s32.totalorder %s20, 1
      %p57 = por %p55, %p56
      %p58 = scmp.ne.s32.totalorder %s47, %s48
      %p59 = scmp.eq.s32.totalorder %s20, 0
      %p60 = por %p58, %p59
      %p61 = scmp.ne.s32.totalorder %s47, %s48
      %p62 = scmp.eq.s32.totalorder %s21, 1
      %p63 = por %p61, %p62
      %p65 = scmp.ne.s32.totalorder %s48, %s64
      %p66 = scmp.eq.s32.totalorder %s21, 0
      %p67 = por %p65, %p66
      %s68 = ssub.s32 %s23, %s37
      %p69 = scmp.eq.s32.totalorder %s68, 0
      %s71 = sadd.s32 %s70, 1
      %s72 = scalar_select %p69, %s70, %s71
      %p75 = pneg %p69
      %p76 = scmp.eq.s32.totalorder %s15, 1
      %p77 = por %p75, %p76
      %p78 = scmp.ne.s32.totalorder %s70, %s73
      %p79 = scmp.eq.s32.totalorder %s15, 0
      %p80 = por %p78, %p79
      %p81 = scmp.ne.s32.totalorder %s70, %s73
      %p82 = scmp.eq.s32.totalorder %s20, 1
      %p83 = por %p81, %p82
      %p84 = scmp.ne.s32.totalorder %s73, %s74
      %p85 = scmp.eq.s32.totalorder %s20, 0
      %p86 = por %p84, %p85
      %p87 = scmp.ne.s32.totalorder %s73, %s74
      %p88 = scmp.eq.s32.totalorder %s21, 1
      %p89 = por %p87, %p88
      %p91 = scmp.ne.s32.totalorder %s74, %s90
      %p92 = scmp.eq.s32.totalorder %s21, 0
      %p93 = por %p91, %p92
      %s94 = ssub.s32 %s22, %s41
      %s95 = ssub.s32 %s23, %s37
      %s96 = sor.u32 %s94, %s95
      %s97 = ssub.s32 %s24, %s33
      %s98 = sor.u32 %s96, %s97
      %p99 = scmp.eq.s32.totalorder %s98, 0
      %s101 = sadd.s32 %s100, 1
      %s102 = scalar_select %p99, %s100, %s101
      %p105 = pneg %p99
      %p106 = scmp.eq.s32.totalorder %s15, 1
      %p107 = por %p105, %p106
      %p108 = scmp.ne.s32.totalorder %s100, %s103
      %p109 = scmp.eq.s32.totalorder %s15, 0
      %p110 = por %p108, %p109
      %p111 = scmp.ne.s32.totalorder %s100, %s103
      %p112 = scmp.eq.s32.totalorder %s20, 1
      %p113 = por %p111, %p112
      %p114 = scmp.ne.s32.totalorder %s103, %s104
      %p115 = scmp.eq.s32.totalorder %s20, 0
      %p116 = por %p114, %p115
      %p117 = scmp.ne.s32.totalorder %s103, %s104
      %p118 = scmp.eq.s32.totalorder %s21, 1
      %p119 = por %p117, %p118
      %p121 = scmp.ne.s32.totalorder %s104, %s120
      %p122 = scmp.eq.s32.totalorder %s21, 0
      %p123 = por %p121, %p122
      %p124 = scmp.le.s32.totalorder 1, %s15
      %p125 = scmp.lt.s32.totalorder %s15, 3
      %p126 = pnand %p124, %p125
      %p127 = pneg %p126
      // Predicated region
      $region9: #{tpu_custom_call.1} parent=5 // pred_check
        _
      $region10: #{tpu_custom_call.1} parent=5 // pred_check_branch
        %129 = sbr.rel (%p126) target = $region12
      $region11: #{tpu_custom_call.1} parent=5 // pred_region
        %s130 = ssub.s32 %s15, 1
        // Predicated region
        $region13: #{tpu_custom_call.1} parent=11 // pred_check
          %p131 = pneg %p86
        $region14: #{tpu_custom_call.1} parent=11 // pred_check_branch
          %133 = sbr.rel (%p131) target = $region16
        $region15: #{tpu_custom_call.1} parent=11 // pred_region
          %s135 = ssub.s32 128, 128
          %136 = vsyncadd [#allocation6], %s135
          %s137 = smul.addr %s26, 128
          %s138 = scalar_lea.hbm %s1, %s137
          %s140 = sshll.u32 [#allocation5], 4
          %s141 = int_to_ptr.vmem [resolvable:$true] %s140
          %143 = dma.hbm_to_vmem [thread:$0]  %s138, 128, %s141, [#allocation6]
        $region16: #{tpu_custom_call.1} parent=11 // pred_fallthru
          _
      $region12: #{tpu_custom_call.1} parent=5 // pred_fallthru
        _
      %p144 = scmp.lt.s32.totalorder %s15, 2
      // Predicated region
      $region17: #{tpu_custom_call.1} parent=5 // pred_check
        %p145 = pneg %p144
      $region18: #{tpu_custom_call.1} parent=5 // pred_check_branch
        %147 = sbr.rel (%p145) target = $region20
      $region19: #{tpu_custom_call.1} parent=5 // pred_region
        // Predicated region
        $region21: #{tpu_custom_call.1} parent=19 // pred_check
          %p148 = pneg %p54
        $region22: #{tpu_custom_call.1} parent=19 // pred_check_branch
          %150 = sbr.rel (%p148) target = $region24
        $region23: #{tpu_custom_call.1} parent=19 // pred_region
          %s151 = sand.u32 %s44, 1
          %s152 = scalar_lea.sflag [#allocation3], %s151
          %s153 = sand.u32 %s44, 1
          %s154 = smul.addr %s153, 8
          %s155 = scalar_lea.vmem [#allocation2], %s154
          %s157 = ssub.s32 128, 128
          %158 = vsyncadd %s152, %s157
          %s159 = smul.addr %s22, 2
          %s160 = smul.addr %s159, 64
          %s161 = scalar_lea.hbm %s0, %s160
          %s163 = sshll.u32 %s155, 4
          %s164 = int_to_ptr.vmem [resolvable:$true] %s163
          %166 = dma.hbm_to_vmem [thread:$0]  %s161, 128, %s164, %s152
        $region24: #{tpu_custom_call.1} parent=19 // pred_fallthru
          _
      $region20: #{tpu_custom_call.1} parent=5 // pred_fallthru
        _
      %p167 = scmp.le.s32.totalorder 1, %s15
      %p168 = scmp.lt.s32.totalorder %s15, 3
      %p169 = pnand %p167, %p168
      %p170 = pneg %p169
      // Predicated region
      $region25: #{tpu_custom_call.1} parent=5 // pred_check
        _
      $region26: #{tpu_custom_call.1} parent=5 // pred_check_branch
        %172 = sbr.rel (%p169) target = $region28
      $region27: #{tpu_custom_call.1} parent=5 // pred_region
        %s173 = ssub.s32 %s15, 1
        %s174 = sand.u32 %s47, 1
        %s175 = scalar_lea.sflag [#allocation3], %s174
        %s176 = sand.u32 %s47, 1
        %s177 = smul.addr %s176, 8
        %s178 = scalar_lea.vmem [#allocation2], %s177
        // Predicated region
        $region29: #{tpu_custom_call.1} parent=27 // pred_check
          %p179 = pneg %p60
        $region30: #{tpu_custom_call.1} parent=27 // pred_check_branch
          %181 = sbr.rel (%p179) target = $region32
        $region31: #{tpu_custom_call.1} parent=27 // pred_region
          %182 = dma.done %s175, 128
        $region32: #{tpu_custom_call.1} parent=27 // pred_fallthru
          _
        // Predicated region
        $region33: #{tpu_custom_call.1} parent=27 // pred_check
          %p183 = pneg %p86
        $region34: #{tpu_custom_call.1} parent=27 // pred_check_branch
          %185 = sbr.rel (%p183) target = $region36
        $region35: #{tpu_custom_call.1} parent=27 // pred_region
          %186 = dma.done [#allocation6], 128
        $region36: #{tpu_custom_call.1} parent=27 // pred_fallthru
          _
        %s187 = sand.u32 %s47, 1
        %s188 = scalar_lea.sflag [#allocation3], %s187
        %s189 = sand.u32 %s47, 1
        %s190 = smul.addr %s189, 8
        %s191 = scalar_lea.vmem [#allocation2], %s190
        %p192 = pneg %p60
        %p193 = pneg %p57
        %p194 = pneg %p86
        %p195 = pneg %p83
        %p196 = pneg %p116
        %p197 = pneg %p113
        %s198 = sand.u32 %s103, 1
        %s199 = scalar_lea.sflag [#allocation4], %s198
        %s200 = sand.u32 %s103, 1
        %s201 = smul.addr %s200, 8
        %s202 = scalar_lea.vmem [#allocation7], %s201
        %s203 = smul.u32 %s27, 128
        %s204 = sshra.s32 %s203, 7
        %s205 = sand.u32 %s203, 127
        %s206 = smul.addr %s204, 4
        %s207 = scalar_lea.vmem %s178, %s206 [#allocation2]
        %v208 = vld [vmem:[%s207] sm:$0xff]
        %v210 = vcombine.high %v208, %v208
        %vm212 = vcmask 1043456
        %v213 = vsel %vm212, %v208, 0.0
        %v214 = vrot.slane %v213, 4
        %v215 = vadd.f32 %v213, %v214
        %v216 = vrot.slane %v215, 2
        %v217 = vadd.f32 %v215, %v216
        %v218 = vrot.slane %v217, 1
        %v219 = vadd.f32 %v217, %v218
        %vm220 = vcmask 52224
        %v221 = vsel %vm220, %v210, 0.0
        %v222 = vrot.slane %v221, 4
        %v223 = vadd.f32 %v221, %v222
        %v224 = vrot.slane %v223, 2
        %v225 = vadd.f32 %v223, %v224
        %v226 = vrot.slane %v225, 1
        %v227 = vadd.f32 %v225, %v226
        %230 = vrot.lane.b32.xlu0 %v219, 127
        %v231 = vpop.permute.xlu0 %230
        %232 = vrot.lane.b32.xlu0 %v227, 127
        %v233 = vpop.permute.xlu0 %232
        %vm234 = vcmask 1039360
        %v235 = vsel %vm234, %v231, %v233
        %237 = vrot.lane.b32.xlu0 %v219, 126
        %v238 = vpop.permute.xlu0 %237
        %239 = vrot.lane.b32.xlu0 %v227, 126
        %v240 = vpop.permute.xlu0 %239
        %vm241 = vcmask 1031168
        %v242 = vsel %vm241, %v238, %v240
        %244 = vrot.lane.b32.xlu0 %v219, 125
        %v245 = vpop.permute.xlu0 %244
        %246 = vrot.lane.b32.xlu0 %v227, 125
        %v247 = vpop.permute.xlu0 %246
        %vm248 = vcmask 1022976
        %v249 = vsel %vm248, %v245, %v247
        %251 = vrot.lane.b32.xlu0 %v219, 124
        %v252 = vpop.permute.xlu0 %251
        %253 = vrot.lane.b32.xlu0 %v227, 124
        %v254 = vpop.permute.xlu0 %253
        %vm255 = vcmask 1014784
        %v256 = vsel %vm255, %v252, %v254
        %258 = vrot.lane.b32.xlu0 %v219, 123
        %v259 = vpop.permute.xlu0 %258
        %260 = vrot.lane.b32.xlu0 %v227, 123
        %v261 = vpop.permute.xlu0 %260
        %vm262 = vcmask 1006592
        %v263 = vsel %vm262, %v259, %v261
        %265 = vrot.lane.b32.xlu0 %v219, 122
        %v266 = vpop.permute.xlu0 %265
        %267 = vrot.lane.b32.xlu0 %v227, 122
        %v268 = vpop.permute.xlu0 %267
        %vm269 = vcmask 998400
        %v270 = vsel %vm269, %v266, %v268
        %272 = vrot.lane.b32.xlu0 %v219, 121
        %v273 = vpop.permute.xlu0 %272
        %274 = vrot.lane.b32.xlu0 %v227, 121
        %v275 = vpop.permute.xlu0 %274
        %vm276 = vcmask 990208
        %v277 = vsel %vm276, %v273, %v275
        %vm279 = vcmask 1040384
        %v280 = vsel %vm279, %v219, %v235
        %vm281 = vcmask 1041408
        %v282 = vsel %vm281, %v280, %v242
        %vm283 = vcmask 1042432
        %v284 = vsel %vm283, %v282, %v249
        %v285 = vsel %vm212, %v284, %v256
        %vm286 = vcmask 1044480
        %v287 = vsel %vm286, %v285, %v263
        %vm288 = vcmask 1045504
        %v289 = vsel %vm288, %v287, %v270
        %vm290 = vcmask 1046528
        %v291 = vsel %vm290, %v289, %v277
        %v292 = vld [vmem:[#allocation5] sm:$0xff]
        %vm293 = vcmask 64512
        %v295 = vsel %vm293, %v292, 0
        %297 = vmatprep.subr.mxu0 0.0
        %298 = vmatpush1.msra.mxu0 %v291
        %299 = vmatprep.subr.mxu0 0.0
        %300 = vmatpush1.msra.mxu0 0.0
        %301 = vmatprep.subr.mxu0 0.0
        %302 = vmatpush1.msra.mxu0 0.0
        %303 = vmatprep.subr.mxu0 0.0
        %304 = vmatpush1.msra.mxu0 0.0
        %305 = vmatprep.subr.mxu0 0.0
        %306 = vmatpush1.msra.mxu0 0.0
        %307 = vmatprep.subr.mxu0 0.0
        %308 = vmatpush1.msra.mxu0 0.0
        %309 = vmatprep.subr.mxu0 0.0
        %310 = vmatpush1.msra.mxu0 0.0
        %311 = vmatprep.subr.mxu0 0.0
        %312 = vmatpush1.msra.mxu0 0.0
        %313 = vmatprep.subr.mxu0 0.0
        %314 = vmatpush1.msra.mxu0 0.0
        %315 = vmatprep.subr.mxu0 0.0
        %316 = vmatpush1.msra.mxu0 0.0
        %317 = vmatprep.subr.mxu0 0.0
        %318 = vmatpush1.msra.mxu0 0.0
        %319 = vmatprep.subr.mxu0 0.0
        %320 = vmatpush1.msra.mxu0 0.0
        %321 = vmatprep.subr.mxu0 0.0
        %322 = vmatpush1.msra.mxu0 0.0
        %323 = vmatprep.subr.mxu0 0.0
        %324 = vmatpush1.msra.mxu0 0.0
        %325 = vmatprep.subr.mxu0 0.0
        %326 = vmatpush1.msra.mxu0 0.0
        %327 = vmatprep.subr.mxu0 0.0
        %328 = vmatpush1.msra.mxu0 0.0
        %329 = vmatprep.subr.mxu0 0.0
        %330 = vmatpush1.msra.mxu0 0.0
        %331 = vmatprep.subr.mxu0 0.0
        %332 = vmatpush1.msra.mxu0 0.0
        %333 = vmatprep.subr.mxu0 0.0
        %334 = vmatpush1.msra.mxu0 0.0
        %335 = vmatprep.subr.mxu0 0.0
        %336 = vmatpush1.msra.mxu0 0.0
        %337 = vmatprep.subr.mxu0 0.0
        %338 = vmatpush1.msra.mxu0 0.0
        %339 = vmatprep.subr.mxu0 0.0
        %340 = vmatpush1.msra.mxu0 0.0
        %341 = vmatprep.subr.mxu0 0.0
        %342 = vmatpush1.msra.mxu0 0.0
        %343 = vmatprep.subr.mxu0 0.0
        %344 = vmatpush1.msra.mxu0 0.0
        %345 = vmatprep.subr.mxu0 0.0
        %346 = vmatpush1.msra.mxu0 0.0
        %347 = vmatprep.subr.mxu0 0.0
        %348 = vmatpush1.msra.mxu0 0.0
        %349 = vmatprep.subr.mxu0 0.0
        %350 = vmatpush1.msra.mxu0 0.0
        %351 = vmatprep.subr.mxu0 0.0
        %352 = vmatpush1.msra.mxu0 0.0
        %353 = vmatprep.subr.mxu0 0.0
        %354 = vmatpush1.msra.mxu0 0.0
        %355 = vmatprep.subr.mxu0 0.0
        %356 = vmatpush1.msra.mxu0 0.0
        %357 = vmatprep.subr.mxu0 0.0
        %358 = vmatpush1.msra.mxu0 0.0
        %359 = vmatprep.subr.mxu0 0.0
        %360 = vmatpush1.msra.mxu0 0.0
        %361 = vmatprep.mubr.f32.mxu0 0.0
        %362 = vmatmul.mubr.f32.gmra.mrb[0].mxu0 %v295
        %v363 = vpop.f32.mrb[0].mxu0
        %v364 = vadd.f32 0.0, %v363
        %v365 = vpop.f32.mrb[0].mxu0
        %366 = vdwg.mxu0
        %367 = vst [vmem:[%s202] sm:$0xff] %v364
        %s368 = sand.u32 %s103, 1
        %s369 = scalar_lea.sflag [#allocation4], %s368
        %s370 = sand.u32 %s103, 1
        %s371 = smul.addr %s370, 8
        %s372 = scalar_lea.vmem [#allocation7], %s371
        // Predicated region
        $region37: #{tpu_custom_call.1} parent=27 // pred_check
          %p373 = pneg %p113
        $region38: #{tpu_custom_call.1} parent=27 // pred_check_branch
          %375 = sbr.rel (%p373) target = $region40
        $region39: #{tpu_custom_call.1} parent=27 // pred_region
          %s377 = ssub.s32 128, 128
          %378 = vsyncadd %s369, %s377
          %s379 = sadd.s32 %s27, %s26
          %s380 = sadd.s32 %s379, %s25
          %s381 = smul.addr %s380, 128
          %s382 = scalar_lea.hbm %s2, %s381
          %s384 = sshll.u32 %s372, 4
          %s385 = int_to_ptr.vmem [resolvable:$true] %s384
          %387 = dma.vmem_to_hbm [thread:$0]  %s385, 128, %s382, %s369
        $region40: #{tpu_custom_call.1} parent=27 // pred_fallthru
          _
      $region28: #{tpu_custom_call.1} parent=5 // pred_fallthru
        _
      %p388 = scmp.le.s32.totalorder 2, %s15
      // Predicated region
      $region41: #{tpu_custom_call.1} parent=5 // pred_check
        %p389 = pneg %p388
      $region42: #{tpu_custom_call.1} parent=5 // pred_check_branch
        %391 = sbr.rel (%p389) target = $region44
      $region43: #{tpu_custom_call.1} parent=5 // pred_region
        %s392 = ssub.s32 %s15, 2
        // Predicated region
        $region45: #{tpu_custom_call.1} parent=43 // pred_check
          %p393 = pneg %p119
        $region46: #{tpu_custom_call.1} parent=43 // pred_check_branch
          %395 = sbr.rel (%p393) target = $region48
        $region47: #{tpu_custom_call.1} parent=43 // pred_region
          %s396 = sand.u32 %s104, 1
          %s397 = scalar_lea.sflag [#allocation4], %s396
          %s398 = sand.u32 %s104, 1
          %s399 = smul.addr %s398, 8
          %s400 = scalar_lea.vmem [#allocation7], %s399
          %401 = dma.done %s397, 128
        $region48: #{tpu_custom_call.1} parent=43 // pred_fallthru
          _
      $region44: #{tpu_custom_call.1} parent=5 // pred_fallthru
        _
    $region6: #{tpu_custom_call.1} parent=1 // loop_footer
      %s19 = sadd.s32 1, %s15
    $region7: #{tpu_custom_call.1} parent=1 // loop_footer_branch
      %14 = sbr.rel target = $region3
    $region8: #{tpu_custom_call.1} parent=1 // loop_exit
      _
    %402 = vsyncpa [#allocation3], 1
    %s403 = scalar_lea.sflag [#allocation3], 1
    %404 = vsyncpa %s403, 1
    %405 = vsyncpa [#allocation6], 1
    %406 = vsyncpa [#allocation4], 1
    %s407 = scalar_lea.sflag [#allocation4], 1
    %408 = vsyncpa %s407, 1

</llo_original>
